<compile_context>
chip_gen: v7x
topology: tpu7x:2x2x1
jax: 0.10.0
libtpu: 0.0.40
codegen_flags: <defaults>
</compile_context>

<pallas_src>
import jax
import jax.numpy as jnp
from jax.experimental import pallas as pl
from jax.experimental.pallas import tpu as pltpu

D_IN = 126
D_H = 256
D_H2 = 128
N_CLASSES = 29
N_OUT_PAD = 128          # lane-dense padded class dimension
BN_EPS = 1e-5


def _mlp_kernel(x_ref,
                w1, b1, w2, b2, w3, b3, w4, b4, w5, b5,
                o_ref):
    """One batch tile of the whole MLP (weights bf16, accum/elementwise f32)."""
    bf16 = jnp.bfloat16
    f32 = jnp.float32

    # Block 1: Linear(126->256) + ReLU   (BN1 folded into W2/b2)
    h = jnp.dot(x_ref[...].astype(bf16), w1[...], preferred_element_type=f32)
    h = jnp.maximum(h + b1[...], 0.0).astype(bf16)   # f32 math, bf16 staging

    # Block 2: Linear(256->256) + ReLU   (BN2 folded into W3/b3)
    h = jnp.dot(h, w2[...], preferred_element_type=f32)
    h = jnp.maximum(h + b2[...], 0.0).astype(bf16)

    # Block 3: Linear(256->256) + ReLU   (BN3 folded into W4/b4)
    h = jnp.dot(h, w3[...], preferred_element_type=f32)
    h = jnp.maximum(h + b3[...], 0.0).astype(bf16)

    # Block 4: Linear(256->128) + ReLU   (BN4 folded into W5/b5)
    h = jnp.dot(h, w4[...], preferred_element_type=f32)
    h = jnp.maximum(h + b4[...], 0.0).astype(bf16)

    # Dropout(p=0.25) -> identity in eval mode.
    # Head: Linear(128->29), zero-padded to 128 output lanes so the store is a
    # full-width unmasked vst (padded logit columns are sliced off outside).
    o_ref[...] = jnp.dot(h, w5[...], preferred_element_type=f32) + b5[...]


def _round_up(n, m):
    return ((n + m - 1) // m) * m


def asl_deepnet_forward(x, params, *, block_batch=2048):
    """x: [B, 126] float32.  Returns logits [B, 29] float32."""
    B, f_in = x.shape
    assert f_in == D_IN, f_in

    # Batch tile: large default to amortize per-step overhead, but never
    # bigger than (rounded-up) B for small batches.
    tb = min(block_batch, _round_up(B, 8))
    # v7x megacore: at moderate/large batches, cap the tile so the grid has
    # >= 4 steps and ("parallel",) can shard across both TensorCores.
    # Harmless on single-TC v5e/v6e.
    if B >= 1024:
        tb = min(tb, max(256, _round_up(pl.cdiv(B, 4), 16)))
    grid = (pl.cdiv(B, tb),)

    weight_args = []
    in_specs = [pl.BlockSpec((tb, D_IN), lambda i: (i, 0))]  # streamed x tile
    for li in range(1, 6):
        w = params[f"w{li}"]
        b = params[f"b{li}"]
        weight_args += [w, b]
        # Constant index maps -> params stay resident in VMEM across grid steps.
        in_specs += [pl.BlockSpec(w.shape, lambda i: (0, 0)),
                     pl.BlockSpec(b.shape, lambda i: (0, 0))]

    out_padded = pl.pallas_call(
        _mlp_kernel,
        out_shape=jax.ShapeDtypeStruct((B, N_OUT_PAD), jnp.float32),
        grid=grid,
        in_specs=in_specs,
        out_specs=pl.BlockSpec((tb, N_OUT_PAD), lambda i: (i, 0)),
        compiler_params=pltpu.CompilerParams(
            dimension_semantics=("parallel",)),
    )(x, *weight_args)
    # Drop the zero-padded logit columns (lane-dense store inside the kernel).
    return out_padded[:, :N_CLASSES]


# --------------------------------------------------------------------------
# Parameter construction (PyTorch-style raw params) + eval-mode BN folding.
# --------------------------------------------------------------------------

_DIMS = [(D_IN, D_H), (D_H, D_H), (D_H, D_H), (D_H, D_H2), (D_H2, N_CLASSES)]


def init_raw_params(key):
    """Raw params matching the PyTorch module (weights stored as [in, out])."""
    f32 = jnp.float32
    ks = jax.random.split(key, 2 * len(_DIMS) + 3 * 4)
    raw = {}
    k = 0
    for li, (fan_in, fan_out) in enumerate(_DIMS, start=1):
        bound = float(fan_in) ** -0.5
        raw[f"w{li}"] = jax.random.uniform(ks[k], (fan_in, fan_out), f32, -bound, bound)
        raw[f"b{li}"] = jax.random.uniform(ks[k + 1], (fan_out,), f32, -bound, bound)
        k += 2
    for bi in range(1, 5):
        n = _DIMS[bi - 1][1]
        raw[f"gamma{bi}"] = 1.0 + 0.01 * jax.random.normal(ks[k], (n,), f32)
        raw[f"beta{bi}"] = 0.01 * jax.random.normal(ks[k + 1], (n,), f32)
        raw[f"mean{bi}"] = 0.05 * jax.random.normal(ks[k + 2], (n,), f32)
        raw[f"var{bi}"] = jnp.ones((n,), f32)
        k += 3
    return raw


def fold_params(raw, eps=BN_EPS):
    """Fold eval-mode BN_i affine into layer i+1; cast weights to bf16.

    The head layer (w5/b5) is zero-padded from 29 to 128 output columns so the
    kernel's final store is lane-dense; the wrapper slices the padding off.
    """
    p = {"w1": raw["w1"].astype(jnp.bfloat16),
         "b1": raw["b1"].reshape(1, -1).astype(jnp.float32)}
    for li in range(2, 6):
        bi = li - 1
        scale = raw[f"gamma{bi}"] / jnp.sqrt(raw[f"var{bi}"] + eps)
        shift = raw[f"beta{bi}"] - raw[f"mean{bi}"] * scale
        w = raw[f"w{li}"]
        b = raw[f"b{li}"]
        w_fold = scale[:, None] * w          # diag(scale) @ W
        b_fold = b + shift @ w               # shift routed through W
        if li == 5:
            pad = N_OUT_PAD - N_CLASSES
            w_fold = jnp.pad(w_fold, ((0, 0), (0, pad)))
            b_fold = jnp.pad(b_fold, ((0, pad),))
        p[f"w{li}"] = w_fold.astype(jnp.bfloat16)
        p[f"b{li}"] = b_fold.reshape(1, -1).astype(jnp.float32)
    return p


# --------------------------------------------------------------------------
# References (for correctness checks).
# --------------------------------------------------------------------------

def reference_forward_fp32(x, raw, eps=BN_EPS):
    """Direct fp32 emulation of the PyTorch eval-mode forward (unfolded BN)."""
    h = x
    for li in range(1, 5):
        h = h @ raw[f"w{li}"] + raw[f"b{li}"]
        h = jnp.maximum(h, 0.0)
        scale = raw[f"gamma{li}"] / jnp.sqrt(raw[f"var{li}"] + eps)
        shift = raw[f"beta{li}"] - raw[f"mean{li}"] * scale
        h = h * scale + shift
    # Dropout identity in eval mode.
    return h @ raw["w5"] + raw["b5"]


def reference_forward_folded(x, p):
    """Same math as the kernel (folded BN, bf16 matmul inputs, f32 accum)."""
    bf16 = jnp.bfloat16
    f32 = jnp.float32
    h = x
    for li in range(1, 5):
        h = jnp.dot(h.astype(bf16), p[f"w{li}"], preferred_element_type=f32) + p[f"b{li}"]
        h = jnp.maximum(h, 0.0)
    out = jnp.dot(h.astype(bf16), p["w5"], preferred_element_type=f32) + p["b5"]
    return out[:, :N_CLASSES]


if __name__ == "__main__":
    key = jax.random.PRNGKey(0)
    k_x, k_x2, k_p = jax.random.split(key, 3)

    raw = init_raw_params(k_p)
    params = fold_params(raw)

    # Case 1: small aligned batch, single grid step.
    B1 = 8
    x1 = jax.random.normal(k_x, (B1, D_IN), jnp.float32)
    out1 = jax.block_until_ready(asl_deepnet_forward(x1, params))
    assert out1.shape == (B1, N_CLASSES), out1.shape
    ref1 = reference_forward_folded(x1, params)
    assert jnp.allclose(out1, ref1, atol=2e-3, rtol=2e-3), "mismatch vs folded bf16 reference"
    ref1_fp32 = reference_forward_fp32(x1, raw)
    assert jnp.allclose(out1, ref1_fp32, atol=5e-2, rtol=5e-2), "mismatch vs fp32 module reference"

    # Case 2: ragged batch over a multi-step grid (exercises tiling/border masking).
    B2 = 20
    x2 = jax.random.normal(k_x2, (B2, D_IN), jnp.float32)
    out2 = jax.block_until_ready(asl_deepnet_forward(x2, params, block_batch=8))
    assert out2.shape == (B2, N_CLASSES), out2.shape
    ref2 = reference_forward_folded(x2, params)
    assert jnp.allclose(out2, ref2, atol=2e-3, rtol=2e-3), "mismatch vs folded bf16 reference (ragged)"

    print("KERNEL_OK")
</pallas_src>

<mosaic_0001>
module attributes {stable_mosaic.version = 11 : i64} {
  func.func @_mlp_kernel(%arg0: i32, %arg1: memref<8x126xf32, #tpu.memory_space<vmem>>, %arg2: memref<126x256xbf16, #tpu.memory_space<vmem>>, %arg3: memref<1x256xf32, #tpu.memory_space<vmem>>, %arg4: memref<256x256xbf16, #tpu.memory_space<vmem>>, %arg5: memref<1x256xf32, #tpu.memory_space<vmem>>, %arg6: memref<256x256xbf16, #tpu.memory_space<vmem>>, %arg7: memref<1x256xf32, #tpu.memory_space<vmem>>, %arg8: memref<256x128xbf16, #tpu.memory_space<vmem>>, %arg9: memref<1x128xf32, #tpu.memory_space<vmem>>, %arg10: memref<128x128xbf16, #tpu.memory_space<vmem>>, %arg11: memref<1x128xf32, #tpu.memory_space<vmem>>, %arg12: memref<8x128xf32, #tpu.memory_space<vmem>>) attributes {dimension_semantics = [#tpu.dimension_semantics<parallel>], iteration_bounds = array<i64: 1>, scalar_prefetch = 0 : i64, scratch_operands = 0 : i64, tpu.core_type = #tpu.core_type<tc>, window_params = [{transform_indices = @transform_0, window_bounds = array<i64: 8, 126>}, {pipeline_mode = #tpu.pipeline_mode<synchronous>, transform_indices = @transform_1, window_bounds = array<i64: 126, 256>}, {pipeline_mode = #tpu.pipeline_mode<synchronous>, transform_indices = @transform_2, window_bounds = array<i64: 1, 256>}, {pipeline_mode = #tpu.pipeline_mode<synchronous>, transform_indices = @transform_3, window_bounds = array<i64: 256, 256>}, {pipeline_mode = #tpu.pipeline_mode<synchronous>, transform_indices = @transform_4, window_bounds = array<i64: 1, 256>}, {pipeline_mode = #tpu.pipeline_mode<synchronous>, transform_indices = @transform_5, window_bounds = array<i64: 256, 256>}, {pipeline_mode = #tpu.pipeline_mode<synchronous>, transform_indices = @transform_6, window_bounds = array<i64: 1, 256>}, {pipeline_mode = #tpu.pipeline_mode<synchronous>, transform_indices = @transform_7, window_bounds = array<i64: 256, 128>}, {pipeline_mode = #tpu.pipeline_mode<synchronous>, transform_indices = @transform_8, window_bounds = array<i64: 1, 128>}, {pipeline_mode = #tpu.pipeline_mode<synchronous>, transform_indices = @transform_9, window_bounds = array<i64: 128, 128>}, {pipeline_mode = #tpu.pipeline_mode<synchronous>, transform_indices = @transform_10, window_bounds = array<i64: 1, 128>}, {transform_indices = @transform_11, window_bounds = array<i64: 8, 128>}]} {
    %c0 = arith.constant 0 : index
    %c0_0 = arith.constant 0 : index
    %0 = vector.load %arg1[%c0, %c0_0] : memref<8x126xf32, #tpu.memory_space<vmem>>, vector<8x126xf32>
    %1 = arith.truncf %0 : vector<8x126xf32> to vector<8x126xbf16>
    %c0_1 = arith.constant 0 : index
    %c0_2 = arith.constant 0 : index
    %2 = vector.load %arg2[%c0_1, %c0_2] : memref<126x256xbf16, #tpu.memory_space<vmem>>, vector<126x256xbf16>
    %cst = arith.constant dense<0.000000e+00> : vector<8x256xf32>
    %3 = tpu.matmul %1, %2, %cst {dimension_numbers = #tpu.dot_dimension_numbers<[1], [0], [0], [1], [0, 0, 1, 1], [], []>} : vector<8x126xbf16>, vector<126x256xbf16>, vector<8x256xf32> -> vector<8x256xf32>
    %c0_3 = arith.constant 0 : index
    %c0_4 = arith.constant 0 : index
    %4 = vector.load %arg3[%c0_3, %c0_4] : memref<1x256xf32, #tpu.memory_space<vmem>>, vector<1x256xf32>
    %5 = vector.broadcast %4 : vector<1x256xf32> to vector<8x256xf32>
    %6 = arith.addf %3, %5 : vector<8x256xf32>
    %cst_5 = arith.constant 0.000000e+00 : f32
    %7 = vector.broadcast %cst_5 : f32 to vector<8x256xf32>
    %8 = arith.maximumf %6, %7 : vector<8x256xf32>
    %9 = arith.truncf %8 : vector<8x256xf32> to vector<8x256xbf16>
    %c0_6 = arith.constant 0 : index
    %c0_7 = arith.constant 0 : index
    %10 = vector.load %arg4[%c0_6, %c0_7] : memref<256x256xbf16, #tpu.memory_space<vmem>>, vector<256x256xbf16>
    %cst_8 = arith.constant dense<0.000000e+00> : vector<8x256xf32>
    %11 = tpu.matmul %9, %10, %cst_8 {dimension_numbers = #tpu.dot_dimension_numbers<[1], [0], [0], [1], [0, 0, 1, 1], [], []>} : vector<8x256xbf16>, vector<256x256xbf16>, vector<8x256xf32> -> vector<8x256xf32>
    %c0_9 = arith.constant 0 : index
    %c0_10 = arith.constant 0 : index
    %12 = vector.load %arg5[%c0_9, %c0_10] : memref<1x256xf32, #tpu.memory_space<vmem>>, vector<1x256xf32>
    %13 = vector.broadcast %12 : vector<1x256xf32> to vector<8x256xf32>
    %14 = arith.addf %11, %13 : vector<8x256xf32>
    %cst_11 = arith.constant 0.000000e+00 : f32
    %15 = vector.broadcast %cst_11 : f32 to vector<8x256xf32>
    %16 = arith.maximumf %14, %15 : vector<8x256xf32>
    %17 = arith.truncf %16 : vector<8x256xf32> to vector<8x256xbf16>
    %c0_12 = arith.constant 0 : index
    %c0_13 = arith.constant 0 : index
    %18 = vector.load %arg6[%c0_12, %c0_13] : memref<256x256xbf16, #tpu.memory_space<vmem>>, vector<256x256xbf16>
    %cst_14 = arith.constant dense<0.000000e+00> : vector<8x256xf32>
    %19 = tpu.matmul %17, %18, %cst_14 {dimension_numbers = #tpu.dot_dimension_numbers<[1], [0], [0], [1], [0, 0, 1, 1], [], []>} : vector<8x256xbf16>, vector<256x256xbf16>, vector<8x256xf32> -> vector<8x256xf32>
    %c0_15 = arith.constant 0 : index
    %c0_16 = arith.constant 0 : index
    %20 = vector.load %arg7[%c0_15, %c0_16] : memref<1x256xf32, #tpu.memory_space<vmem>>, vector<1x256xf32>
    %21 = vector.broadcast %20 : vector<1x256xf32> to vector<8x256xf32>
    %22 = arith.addf %19, %21 : vector<8x256xf32>
    %cst_17 = arith.constant 0.000000e+00 : f32
    %23 = vector.broadcast %cst_17 : f32 to vector<8x256xf32>
    %24 = arith.maximumf %22, %23 : vector<8x256xf32>
    %25 = arith.truncf %24 : vector<8x256xf32> to vector<8x256xbf16>
    %c0_18 = arith.constant 0 : index
    %c0_19 = arith.constant 0 : index
    %26 = vector.load %arg8[%c0_18, %c0_19] : memref<256x128xbf16, #tpu.memory_space<vmem>>, vector<256x128xbf16>
    %cst_20 = arith.constant dense<0.000000e+00> : vector<8x128xf32>
    %27 = tpu.matmul %25, %26, %cst_20 {dimension_numbers = #tpu.dot_dimension_numbers<[1], [0], [0], [1], [0, 0, 1, 1], [], []>} : vector<8x256xbf16>, vector<256x128xbf16>, vector<8x128xf32> -> vector<8x128xf32>
    %c0_21 = arith.constant 0 : index
    %c0_22 = arith.constant 0 : index
    %28 = vector.load %arg9[%c0_21, %c0_22] : memref<1x128xf32, #tpu.memory_space<vmem>>, vector<1x128xf32>
    %29 = vector.broadcast %28 : vector<1x128xf32> to vector<8x128xf32>
    %30 = arith.addf %27, %29 : vector<8x128xf32>
    %cst_23 = arith.constant 0.000000e+00 : f32
    %31 = vector.broadcast %cst_23 : f32 to vector<8x128xf32>
    %32 = arith.maximumf %30, %31 : vector<8x128xf32>
    %33 = arith.truncf %32 : vector<8x128xf32> to vector<8x128xbf16>
    %c0_24 = arith.constant 0 : index
    %c0_25 = arith.constant 0 : index
    %34 = vector.load %arg10[%c0_24, %c0_25] : memref<128x128xbf16, #tpu.memory_space<vmem>>, vector<128x128xbf16>
    %cst_26 = arith.constant dense<0.000000e+00> : vector<8x128xf32>
    %35 = tpu.matmul %33, %34, %cst_26 {dimension_numbers = #tpu.dot_dimension_numbers<[1], [0], [0], [1], [0, 0, 1, 1], [], []>} : vector<8x128xbf16>, vector<128x128xbf16>, vector<8x128xf32> -> vector<8x128xf32>
    %c0_27 = arith.constant 0 : index
    %c0_28 = arith.constant 0 : index
    %36 = vector.load %arg11[%c0_27, %c0_28] : memref<1x128xf32, #tpu.memory_space<vmem>>, vector<1x128xf32>
    %37 = vector.broadcast %36 : vector<1x128xf32> to vector<8x128xf32>
    %38 = arith.addf %35, %37 : vector<8x128xf32>
    %c0_29 = arith.constant 0 : index
    %c0_30 = arith.constant 0 : index
    %39 = vector.load %arg12[%c0_29, %c0_30] : memref<8x128xf32, #tpu.memory_space<vmem>>, vector<8x128xf32>
    tpu.vector_store %arg12[%c0_29, %c0_30], %38 {strides = array<i32>} : memref<8x128xf32, #tpu.memory_space<vmem>>, vector<8x128xf32>,
    return
  }
  func.func @transform_0(%arg0: i32) -> (i32, i32) {
    %c0_i32 = arith.constant 0 : i32
    %c0_i32_0 = arith.constant 0 : i32
    return %arg0, %c0_i32 : i32, i32
  }
  func.func @transform_1(%arg0: i32) -> (i32, i32) {
    %c0_i32 = arith.constant 0 : i32
    %c0_i32_0 = arith.constant 0 : i32
    %c0_i32_1 = arith.constant 0 : i32
    return %c0_i32, %c0_i32_0 : i32, i32
  }
  func.func @transform_2(%arg0: i32) -> (i32, i32) {
    %c0_i32 = arith.constant 0 : i32
    %c0_i32_0 = arith.constant 0 : i32
    %c0_i32_1 = arith.constant 0 : i32
    return %c0_i32, %c0_i32_0 : i32, i32
  }
  func.func @transform_3(%arg0: i32) -> (i32, i32) {
    %c0_i32 = arith.constant 0 : i32
    %c0_i32_0 = arith.constant 0 : i32
    %c0_i32_1 = arith.constant 0 : i32
    return %c0_i32, %c0_i32_0 : i32, i32
  }
  func.func @transform_4(%arg0: i32) -> (i32, i32) {
    %c0_i32 = arith.constant 0 : i32
    %c0_i32_0 = arith.constant 0 : i32
    %c0_i32_1 = arith.constant 0 : i32
    return %c0_i32, %c0_i32_0 : i32, i32
  }
  func.func @transform_5(%arg0: i32) -> (i32, i32) {
    %c0_i32 = arith.constant 0 : i32
    %c0_i32_0 = arith.constant 0 : i32
    %c0_i32_1 = arith.constant 0 : i32
    return %c0_i32, %c0_i32_0 : i32, i32
  }
  func.func @transform_6(%arg0: i32) -> (i32, i32) {
    %c0_i32 = arith.constant 0 : i32
    %c0_i32_0 = arith.constant 0 : i32
    %c0_i32_1 = arith.constant 0 : i32
    return %c0_i32, %c0_i32_0 : i32, i32
  }
  func.func @transform_7(%arg0: i32) -> (i32, i32) {
    %c0_i32 = arith.constant 0 : i32
    %c0_i32_0 = arith.constant 0 : i32
    %c0_i32_1 = arith.constant 0 : i32
    return %c0_i32, %c0_i32_0 : i32, i32
  }
  func.func @transform_8(%arg0: i32) -> (i32, i32) {
    %c0_i32 = arith.constant 0 : i32
    %c0_i32_0 = arith.constant 0 : i32
    %c0_i32_1 = arith.constant 0 : i32
    return %c0_i32, %c0_i32_0 : i32, i32
  }
  func.func @transform_9(%arg0: i32) -> (i32, i32) {
    %c0_i32 = arith.constant 0 : i32
    %c0_i32_0 = arith.constant 0 : i32
    %c0_i32_1 = arith.constant 0 : i32
    return %c0_i32, %c0_i32_0 : i32, i32
  }
  func.func @transform_10(%arg0: i32) -> (i32, i32) {
    %c0_i32 = arith.constant 0 : i32
    %c0_i32_0 = arith.constant 0 : i32
    %c0_i32_1 = arith.constant 0 : i32
    return %c0_i32, %c0_i32_0 : i32, i32
  }
  func.func @transform_11(%arg0: i32) -> (i32, i32) {
    %c0_i32 = arith.constant 0 : i32
    %c0_i32_0 = arith.constant 0 : i32
    return %arg0, %c0_i32 : i32, i32
  }
}

</mosaic_0001>

<llo_original>
// kernel: tpu_custom_call.1
$region0: #{tpu_custom_call.1}
  #allocation0 [shape = 'u32[]', space=smem, size = 0x4, offset = 0x4, fixed_abs, tag = 'smem constant byte address 0x4 - core index']
  #allocation1 [shape = 'u32[144,128]{1,0:T(1,128)}', space=vmem, size = 0x12000, scoped, tag = 'internal scratch']
  %s0 = inlined_call_operand.hbm [shape: f32[8,126], index: 0, kind: input, shape index: {}]
  %s1 = inlined_call_operand.hbm [shape: bf16[126,256], index: 1, kind: input, shape index: {}]
  %s2 = inlined_call_operand.vmem [shape: f32[1,256], index: 2, kind: input, shape index: {}]
  %s3 = inlined_call_operand.hbm [shape: bf16[256,256], index: 3, kind: input, shape index: {}]
  %s4 = inlined_call_operand.vmem [shape: f32[1,256], index: 4, kind: input, shape index: {}]
  %s5 = inlined_call_operand.hbm [shape: bf16[256,256], index: 5, kind: input, shape index: {}]
  %s6 = inlined_call_operand.vmem [shape: f32[1,256], index: 6, kind: input, shape index: {}]
  %s7 = inlined_call_operand.hbm [shape: bf16[256,128], index: 7, kind: input, shape index: {}]
  %s8 = inlined_call_operand.vmem [shape: f32[1,128], index: 8, kind: input, shape index: {}]
  %s9 = inlined_call_operand.hbm [shape: bf16[128,128], index: 9, kind: input, shape index: {}]
  %s10 = inlined_call_operand.vmem [shape: f32[1,128], index: 10, kind: input, shape index: {}]
  %s11 = inlined_call_operand.hbm [shape: f32[8,128], index: 11, kind: output, shape index: {}]
  %s12 = sld [smem:[#allocation0]]
  $region78: #{tpu_custom_call.1} parent=0
    _
  %s14 = ssub.s32 1, %s12
  %s15 = scalar_select 0, %s14, %s12
  $region1: #{tpu_custom_call.1} parent=0
    #allocation2 [shape = 'u8[4096]{0}', space=vmem, size = 0x1000, scoped, tag = 'input window, operand 0, single buffered']
    #allocation3 [shape = 's32[1]{0}', space=sflag, size = 0x4, scoped, tag = 'scoped memory for tpu_custom_call.1']
    #allocation4 [shape = 's32[1]{0}', space=sflag, size = 0x4, scoped, tag = 'scoped memory for tpu_custom_call.1']
    #allocation5 [shape = 'u8[65536]{0}', space=vmem, size = 0x10000, scoped, tag = 'input window, operand 1, single buffered']
    #allocation6 [shape = 's32[1]{0}', space=sflag, size = 0x4, scoped, tag = 'scoped memory for tpu_custom_call.1']
    #allocation7 [shape = 'u8[131072]{0}', space=vmem, size = 0x20000, scoped, tag = 'input window, operand 3, single buffered']
    #allocation8 [shape = 'u8[131072]{0}', space=vmem, size = 0x20000, scoped, tag = 'input window, operand 5, single buffered']
    #allocation9 [shape = 's32[1]{0}', space=sflag, size = 0x4, scoped, tag = 'scoped memory for tpu_custom_call.1']
    #allocation10 [shape = 'u8[65536]{0}', space=vmem, size = 0x10000, scoped, tag = 'input window, operand 7, single buffered']
    #allocation11 [shape = 'u8[32768]{0}', space=vmem, size = 0x8000, scoped, tag = 'input window, operand 9, single buffered']
    #allocation12 [shape = 's32[1]{0}', space=sflag, size = 0x4, scoped, tag = 'scoped memory for tpu_custom_call.1']
    #allocation13 [shape = 'u8[4096]{0}', space=vmem, size = 0x1000, scoped, tag = 'output window, operand 0, single buffered']
    %16 = vsyncpa [#allocation3], 0
    %17 = vsyncpa [#allocation6], 0
    %18 = vsyncpa [#allocation9], 0
    %19 = vsyncpa [#allocation12], 0
    %20 = vsyncpa [#allocation4], 0
    // Predicated region
    $region2: #{tpu_custom_call.1} parent=1 // pred_check
      _
    $region3: #{tpu_custom_call.1} parent=1 // pred_check_branch
      %22 = sbr.rel (0) target = $region5
    $region4: #{tpu_custom_call.1} parent=1 // pred_region
      %s24 = ssub.s32 128, 128
      %25 = vsyncadd [#allocation3], %s24
      %s27 = sshll.u32 [#allocation2], 4
      %s28 = int_to_ptr.vmem [resolvable:$true] %s27
      %30 = dma.hbm_to_vmem [thread:$0]  %s0, 128, %s28, [#allocation3]
    $region5: #{tpu_custom_call.1} parent=1 // pred_fallthru
      _
    // Predicated region
    $region6: #{tpu_custom_call.1} parent=1 // pred_check
      _
    $region7: #{tpu_custom_call.1} parent=1 // pred_check_branch
      %32 = sbr.rel (0) target = $region9
    $region8: #{tpu_custom_call.1} parent=1 // pred_region
      %s34 = ssub.s32 2048, 2048
      %35 = vsyncadd [#allocation6], %s34
      %s36 = sshll.u32 [#allocation5], 4
      %s37 = int_to_ptr.vmem [resolvable:$true] %s36
      %42 = dma.hbm_to_vmem [thread:$0]  %s1, 2048, %s37, [#allocation6], 128, 128, 8
    $region9: #{tpu_custom_call.1} parent=1 // pred_fallthru
      _
    // Predicated region
    $region10: #{tpu_custom_call.1} parent=1 // pred_check
      _
    $region11: #{tpu_custom_call.1} parent=1 // pred_check_branch
      %44 = sbr.rel (0) target = $region13
    $region12: #{tpu_custom_call.1} parent=1 // pred_region
      _
    $region13: #{tpu_custom_call.1} parent=1 // pred_fallthru
      _
    // Predicated region
    $region14: #{tpu_custom_call.1} parent=1 // pred_check
      _
    $region15: #{tpu_custom_call.1} parent=1 // pred_check_branch
      %46 = sbr.rel (0) target = $region17
    $region16: #{tpu_custom_call.1} parent=1 // pred_region
      %s48 = ssub.s32 4096, 4096
      %49 = vsyncadd [#allocation6], %s48
      %s50 = sshll.u32 [#allocation7], 4
      %s51 = int_to_ptr.vmem [resolvable:$true] %s50
      %56 = dma.hbm_to_vmem [thread:$0]  %s3, 4096, %s51, [#allocation6], 128, 128, 8
    $region17: #{tpu_custom_call.1} parent=1 // pred_fallthru
      _
    // Predicated region
    $region18: #{tpu_custom_call.1} parent=1 // pred_check
      _
    $region19: #{tpu_custom_call.1} parent=1 // pred_check_branch
      %58 = sbr.rel (0) target = $region21
    $region20: #{tpu_custom_call.1} parent=1 // pred_region
      _
    $region21: #{tpu_custom_call.1} parent=1 // pred_fallthru
      _
    // Predicated region
    $region22: #{tpu_custom_call.1} parent=1 // pred_check
      _
    $region23: #{tpu_custom_call.1} parent=1 // pred_check_branch
      %60 = sbr.rel (0) target = $region25
    $region24: #{tpu_custom_call.1} parent=1 // pred_region
      %s62 = ssub.s32 4096, 4096
      %63 = vsyncadd [#allocation9], %s62
      %s64 = sshll.u32 [#allocation8], 4
      %s65 = int_to_ptr.vmem [resolvable:$true] %s64
      %70 = dma.hbm_to_vmem [thread:$0]  %s5, 4096, %s65, [#allocation9], 128, 128, 8
    $region25: #{tpu_custom_call.1} parent=1 // pred_fallthru
      _
    // Predicated region
    $region26: #{tpu_custom_call.1} parent=1 // pred_check
      _
    $region27: #{tpu_custom_call.1} parent=1 // pred_check_branch
      %72 = sbr.rel (0) target = $region29
    $region28: #{tpu_custom_call.1} parent=1 // pred_region
      _
    $region29: #{tpu_custom_call.1} parent=1 // pred_fallthru
      _
    // Predicated region
    $region30: #{tpu_custom_call.1} parent=1 // pred_check
      _
    $region31: #{tpu_custom_call.1} parent=1 // pred_check_branch
      %74 = sbr.rel (0) target = $region33
    $region32: #{tpu_custom_call.1} parent=1 // pred_region
      %s76 = ssub.s32 2048, 2048
      %77 = vsyncadd [#allocation9], %s76
      %s78 = sshll.u32 [#allocation10], 4
      %s79 = int_to_ptr.vmem [resolvable:$true] %s78
      %84 = dma.hbm_to_vmem [thread:$0]  %s7, 2048, %s79, [#allocation9], 64, 64, 4
    $region33: #{tpu_custom_call.1} parent=1 // pred_fallthru
      _
    // Predicated region
    $region34: #{tpu_custom_call.1} parent=1 // pred_check
      _
    $region35: #{tpu_custom_call.1} parent=1 // pred_check_branch
      %86 = sbr.rel (0) target = $region37
    $region36: #{tpu_custom_call.1} parent=1 // pred_region
      _
    $region37: #{tpu_custom_call.1} parent=1 // pred_fallthru
      _
    // Predicated region
    $region38: #{tpu_custom_call.1} parent=1 // pred_check
      _
    $region39: #{tpu_custom_call.1} parent=1 // pred_check_branch
      %88 = sbr.rel (0) target = $region41
    $region40: #{tpu_custom_call.1} parent=1 // pred_region
      %s90 = ssub.s32 1024, 1024
      %91 = vsyncadd [#allocation12], %s90
      %s92 = sshll.u32 [#allocation11], 4
      %s93 = int_to_ptr.vmem [resolvable:$true] %s92
      %98 = dma.hbm_to_vmem [thread:$0]  %s9, 1024, %s93, [#allocation12], 64, 64, 4
    $region41: #{tpu_custom_call.1} parent=1 // pred_fallthru
      _
    // Predicated region
    $region42: #{tpu_custom_call.1} parent=1 // pred_check
      _
    $region43: #{tpu_custom_call.1} parent=1 // pred_check_branch
      %100 = sbr.rel (0) target = $region45
    $region44: #{tpu_custom_call.1} parent=1 // pred_region
      _
    $region45: #{tpu_custom_call.1} parent=1 // pred_fallthru
      _
    // Predicated region
    $region46: #{tpu_custom_call.1} parent=1 // pred_check
      _
    $region47: #{tpu_custom_call.1} parent=1 // pred_check_branch
      %102 = sbr.rel (0) target = $region49
    $region48: #{tpu_custom_call.1} parent=1 // pred_region
      %103 = dma.done [#allocation3], 128
    $region49: #{tpu_custom_call.1} parent=1 // pred_fallthru
      _
    // Predicated region
    $region50: #{tpu_custom_call.1} parent=1 // pred_check
      _
    $region51: #{tpu_custom_call.1} parent=1 // pred_check_branch
      %105 = sbr.rel (0) target = $region53
    $region52: #{tpu_custom_call.1} parent=1 // pred_region
      %106 = dma.done [#allocation6], 2048
    $region53: #{tpu_custom_call.1} parent=1 // pred_fallthru
      _
    // Predicated region
    $region54: #{tpu_custom_call.1} parent=1 // pred_check
      _
    $region55: #{tpu_custom_call.1} parent=1 // pred_check_branch
      %108 = sbr.rel (0) target = $region57
    $region56: #{tpu_custom_call.1} parent=1 // pred_region
      %109 = dma.done [#allocation6], 4096
    $region57: #{tpu_custom_call.1} parent=1 // pred_fallthru
      _
    // Predicated region
    $region58: #{tpu_custom_call.1} parent=1 // pred_check
      _
    $region59: #{tpu_custom_call.1} parent=1 // pred_check_branch
      %111 = sbr.rel (0) target = $region61
    $region60: #{tpu_custom_call.1} parent=1 // pred_region
      %112 = dma.done [#allocation9], 4096
    $region61: #{tpu_custom_call.1} parent=1 // pred_fallthru
      _
    // Predicated region
    $region62: #{tpu_custom_call.1} parent=1 // pred_check
      _
    $region63: #{tpu_custom_call.1} parent=1 // pred_check_branch
      %114 = sbr.rel (0) target = $region65
    $region64: #{tpu_custom_call.1} parent=1 // pred_region
      %115 = dma.done [#allocation9], 2048
    $region65: #{tpu_custom_call.1} parent=1 // pred_fallthru
      _
    // Predicated region
    $region66: #{tpu_custom_call.1} parent=1 // pred_check
      _
    $region67: #{tpu_custom_call.1} parent=1 // pred_check_branch
      %117 = sbr.rel (0) target = $region69
    $region68: #{tpu_custom_call.1} parent=1 // pred_region
      %118 = dma.done [#allocation12], 1024
    $region69: #{tpu_custom_call.1} parent=1 // pred_fallthru
      _
    %v120 = vld [vmem:[#allocation2] sm:$0xff]
    %v121 = vpack.c.bf16 %v120, %v120
    %v122 = vld [vmem:[#allocation5] sm:$0xff]
    %v123 = vld [vmem:[#allocation5 + $0x8] sm:$0xff]
    %v124 = vld [vmem:[#allocation5 + $0x10] sm:$0xff]
    %v125 = vld [vmem:[#allocation5 + $0x18] sm:$0xff]
    %v126 = vld [vmem:[#allocation5 + $0x20] sm:$0xff]
    %v127 = vld [vmem:[#allocation5 + $0x28] sm:$0xff]
    %v128 = vld [vmem:[#allocation5 + $0x30] sm:$0xff]
    %v129 = vld [vmem:[#allocation5 + $0x38] sm:$0xff]
    %v130 = vld [vmem:[#allocation5 + $0x40] sm:$0xff]
    %v131 = vld [vmem:[#allocation5 + $0x48] sm:$0xff]
    %v132 = vld [vmem:[#allocation5 + $0x50] sm:$0xff]
    %v133 = vld [vmem:[#allocation5 + $0x58] sm:$0xff]
    %v134 = vld [vmem:[#allocation5 + $0x60] sm:$0xff]
    %v135 = vld [vmem:[#allocation5 + $0x68] sm:$0xff]
    %v136 = vld [vmem:[#allocation5 + $0x70] sm:$0xff]
    %v137 = vld [vmem:[#allocation5 + $0x78] sm:$0x77]
    %v138 = vld [vmem:[%s2] sm:$0x3]
    %v140 = vlaneseq
    %v141 = vshrl.u32 %v140, 7
    %v142 = vsub.s32 0, %v141
    %v143 = vrot.slane %v138, %v142
    %v144 = vlaneseq
    %v145 = vshrl.u32 %v144, 7
    %v146 = vsub.s32 1, %v145
    %v147 = vrot.slane %v138, %v146
    %v166 = vunpack.c.l.b16 %v122
    %v167 = vunpack.c.h.b16 %v122
    %v168 = vunpack.c.l.b16 %v123
    %v169 = vunpack.c.h.b16 %v123
    %v170 = vunpack.c.l.b16 %v124
    %v171 = vunpack.c.h.b16 %v124
    %v172 = vunpack.c.l.b16 %v125
    %v173 = vunpack.c.h.b16 %v125
    %v174 = vunpack.c.l.b16 %v126
    %v175 = vunpack.c.h.b16 %v126
    %v176 = vunpack.c.l.b16 %v127
    %v177 = vunpack.c.h.b16 %v127
    %v178 = vunpack.c.l.b16 %v128
    %v179 = vunpack.c.h.b16 %v128
    %v180 = vunpack.c.l.b16 %v129
    %v181 = vunpack.c.h.b16 %v129
    %v182 = vunpack.c.l.b16 %v130
    %v183 = vunpack.c.h.b16 %v130
    %v184 = vunpack.c.l.b16 %v131
    %v185 = vunpack.c.h.b16 %v131
    %v186 = vunpack.c.l.b16 %v132
    %v187 = vunpack.c.h.b16 %v132
    %v188 = vunpack.c.l.b16 %v133
    %v189 = vunpack.c.h.b16 %v133
    %v190 = vunpack.c.l.b16 %v134
    %v191 = vunpack.c.h.b16 %v134
    %v192 = vunpack.c.l.b16 %v135
    %v193 = vunpack.c.h.b16 %v135
    %v194 = vunpack.c.l.b16 %v136
    %v195 = vunpack.c.h.b16 %v136
    %v196 = vunpack.c.l.b16 %v137
    %v197 = vunpack.c.h.b16 %v137
    %v198 = vpack.c.b16 %v168, %v166
    %v199 = vpack.c.b16 %v169, %v167
    %v200 = vpack.c.b16 %v172, %v170
    %v201 = vpack.c.b16 %v173, %v171
    %v202 = vpack.c.b16 %v176, %v174
    %v203 = vpack.c.b16 %v177, %v175
    %v204 = vpack.c.b16 %v180, %v178
    %v205 = vpack.c.b16 %v181, %v179
    %v206 = vpack.c.b16 %v184, %v182
    %v207 = vpack.c.b16 %v185, %v183
    %v208 = vpack.c.b16 %v188, %v186
    %v209 = vpack.c.b16 %v189, %v187
    %v210 = vpack.c.b16 %v192, %v190
    %v211 = vpack.c.b16 %v193, %v191
    %v212 = vpack.c.b16 %v196, %v194
    %v213 = vpack.c.b16 %v197, %v195
    %vm228 = vcmask 1031168
    %v230 = vsel %vm228, %v121, 0
    %vm232 = vcmask 1046528
    %v234 = vsel %vm232, %v212, 0
    %v237 = vsel %vm232, %v213, 0
    %239 = vmatprep.subr.bf16.mxu0 %v199
    %240 = vmatpush1.bf16.msra.mxu0 %v198
    %241 = vmatprep.subr.bf16.mxu0 %v201
    %242 = vmatpush1.bf16.msra.mxu0 %v200
    %243 = vmatprep.subr.bf16.mxu0 %v203
    %244 = vmatpush1.bf16.msra.mxu0 %v202
    %245 = vmatprep.subr.bf16.mxu0 %v205
    %246 = vmatpush1.bf16.msra.mxu0 %v204
    %247 = vmatprep.subr.bf16.mxu0 %v207
    %248 = vmatpush1.bf16.msra.mxu0 %v206
    %249 = vmatprep.subr.bf16.mxu0 %v209
    %250 = vmatpush1.bf16.msra.mxu0 %v208
    %251 = vmatprep.subr.bf16.mxu0 %v211
    %252 = vmatpush1.bf16.msra.mxu0 %v210
    %253 = vmatprep.subr.bf16.mxu0 %v237
    %254 = vmatpush1.bf16.msra.mxu0 %v234
    %255 = vmatprep.subr.bf16.mxu0 0
    %256 = vmatpush1.bf16.msra.mxu0 0
    %257 = vmatprep.subr.bf16.mxu0 0
    %258 = vmatpush1.bf16.msra.mxu0 0
    %259 = vmatprep.subr.bf16.mxu0 0
    %260 = vmatpush1.bf16.msra.mxu0 0
    %261 = vmatprep.subr.bf16.mxu0 0
    %262 = vmatpush1.bf16.msra.mxu0 0
    %263 = vmatprep.subr.bf16.mxu0 0
    %264 = vmatpush1.bf16.msra.mxu0 0
    %265 = vmatprep.subr.bf16.mxu0 0
    %266 = vmatpush1.bf16.msra.mxu0 0
    %267 = vmatprep.subr.bf16.mxu0 0
    %268 = vmatpush1.bf16.msra.mxu0 0
    %269 = vmatprep.subr.bf16.mxu0 0
    %270 = vmatpush1.bf16.msra.mxu0 0
    %271 = vmatprep.mubr.bf16.mxu0 0
    %272 = vmatmul.mubr.bf16.gmra.mrb[0].mxu0 %v230
    %v273 = vpop.f32.mrb[0].mxu0
    %v274 = vadd.f32 %v143, %v273
    %v275 = vpop.f32.mrb[0].mxu0
    %v276 = vadd.f32 %v147, %v275
    %v277 = vpop.f32.mrb[0].mxu0
    %v278 = vpop.f32.mrb[0].mxu0
    %279 = vdwg.mxu0
    %v280 = vmax.f32 %v274, 0.0
    %v281 = vmax.f32 %v276, 0.0
    %v282 = vpack.c.bf16 %v280, %v280
    %v283 = vpack.c.bf16 %v281, %v281
    %v284 = vld [vmem:[#allocation7] sm:$0xff]
    %v285 = vld [vmem:[#allocation7 + $0x8] sm:$0xff]
    %v286 = vld [vmem:[#allocation7 + $0x10] sm:$0xff]
    %v287 = vld [vmem:[#allocation7 + $0x18] sm:$0xff]
    %v288 = vld [vmem:[#allocation7 + $0x20] sm:$0xff]
    %v289 = vld [vmem:[#allocation7 + $0x28] sm:$0xff]
    %v290 = vld [vmem:[#allocation7 + $0x30] sm:$0xff]
    %v291 = vld [vmem:[#allocation7 + $0x38] sm:$0xff]
    %v292 = vld [vmem:[#allocation7 + $0x40] sm:$0xff]
    %v293 = vld [vmem:[#allocation7 + $0x48] sm:$0xff]
    %v294 = vld [vmem:[#allocation7 + $0x50] sm:$0xff]
    %v295 = vld [vmem:[#allocation7 + $0x58] sm:$0xff]
    %v296 = vld [vmem:[#allocation7 + $0x60] sm:$0xff]
    %v297 = vld [vmem:[#allocation7 + $0x68] sm:$0xff]
    %v298 = vld [vmem:[#allocation7 + $0x70] sm:$0xff]
    %v299 = vld [vmem:[#allocation7 + $0x78] sm:$0xff]
    %v300 = vld [vmem:[#allocation7 + $0x80] sm:$0xff]
    %v301 = vld [vmem:[#allocation7 + $0x88] sm:$0xff]
    %v302 = vld [vmem:[#allocation7 + $0x90] sm:$0xff]
    %v303 = vld [vmem:[#allocation7 + $0x98] sm:$0xff]
    %v304 = vld [vmem:[#allocation7 + $0xa0] sm:$0xff]
    %v305 = vld [vmem:[#allocation7 + $0xa8] sm:$0xff]
    %v306 = vld [vmem:[#allocation7 + $0xb0] sm:$0xff]
    %v307 = vld [vmem:[#allocation7 + $0xb8] sm:$0xff]
    %v308 = vld [vmem:[#allocation7 + $0xc0] sm:$0xff]
    %v309 = vld [vmem:[#allocation7 + $0xc8] sm:$0xff]
    %v310 = vld [vmem:[#allocation7 + $0xd0] sm:$0xff]
    %v311 = vld [vmem:[#allocation7 + $0xd8] sm:$0xff]
    %v312 = vld [vmem:[#allocation7 + $0xe0] sm:$0xff]
    %v313 = vld [vmem:[#allocation7 + $0xe8] sm:$0xff]
    %v314 = vld [vmem:[#allocation7 + $0xf0] sm:$0xff]
    %v315 = vld [vmem:[#allocation7 + $0xf8] sm:$0xff]
    %v316 = vld [vmem:[%s4] sm:$0x3]
    %v318 = vlaneseq
    %v319 = vshrl.u32 %v318, 7
    %v320 = vsub.s32 0, %v319
    %v321 = vrot.slane %v316, %v320
    %v322 = vlaneseq
    %v323 = vshrl.u32 %v322, 7
    %v324 = vsub.s32 1, %v323
    %v325 = vrot.slane %v316, %v324
    %v360 = vunpack.c.l.b16 %v284
    %v361 = vunpack.c.h.b16 %v284
    %v362 = vunpack.c.l.b16 %v285
    %v363 = vunpack.c.h.b16 %v285
    %v364 = vunpack.c.l.b16 %v286
    %v365 = vunpack.c.h.b16 %v286
    %v366 = vunpack.c.l.b16 %v287
    %v367 = vunpack.c.h.b16 %v287
    %v368 = vunpack.c.l.b16 %v288
    %v369 = vunpack.c.h.b16 %v288
    %v370 = vunpack.c.l.b16 %v289
    %v371 = vunpack.c.h.b16 %v289
    %v372 = vunpack.c.l.b16 %v290
    %v373 = vunpack.c.h.b16 %v290
    %v374 = vunpack.c.l.b16 %v291
    %v375 = vunpack.c.h.b16 %v291
    %v376 = vunpack.c.l.b16 %v292
    %v377 = vunpack.c.h.b16 %v292
    %v378 = vunpack.c.l.b16 %v293
    %v379 = vunpack.c.h.b16 %v293
    %v380 = vunpack.c.l.b16 %v294
    %v381 = vunpack.c.h.b16 %v294
    %v382 = vunpack.c.l.b16 %v295
    %v383 = vunpack.c.h.b16 %v295
    %v384 = vunpack.c.l.b16 %v296
    %v385 = vunpack.c.h.b16 %v296
    %v386 = vunpack.c.l.b16 %v297
    %v387 = vunpack.c.h.b16 %v297
    %v388 = vunpack.c.l.b16 %v298
    %v389 = vunpack.c.h.b16 %v298
    %v390 = vunpack.c.l.b16 %v299
    %v391 = vunpack.c.h.b16 %v299
    %v392 = vunpack.c.l.b16 %v300
    %v393 = vunpack.c.h.b16 %v300
    %v394 = vunpack.c.l.b16 %v301
    %v395 = vunpack.c.h.b16 %v301
    %v396 = vunpack.c.l.b16 %v302
    %v397 = vunpack.c.h.b16 %v302
    %v398 = vunpack.c.l.b16 %v303
    %v399 = vunpack.c.h.b16 %v303
    %v400 = vunpack.c.l.b16 %v304
    %v401 = vunpack.c.h.b16 %v304
    %v402 = vunpack.c.l.b16 %v305
    %v403 = vunpack.c.h.b16 %v305
    %v404 = vunpack.c.l.b16 %v306
    %v405 = vunpack.c.h.b16 %v306
    %v406 = vunpack.c.l.b16 %v307
    %v407 = vunpack.c.h.b16 %v307
    %v408 = vunpack.c.l.b16 %v308
    %v409 = vunpack.c.h.b16 %v308
    %v410 = vunpack.c.l.b16 %v309
    %v411 = vunpack.c.h.b16 %v309
    %v412 = vunpack.c.l.b16 %v310
    %v413 = vunpack.c.h.b16 %v310
    %v414 = vunpack.c.l.b16 %v311
    %v415 = vunpack.c.h.b16 %v311
    %v416 = vunpack.c.l.b16 %v312
    %v417 = vunpack.c.h.b16 %v312
    %v418 = vunpack.c.l.b16 %v313
    %v419 = vunpack.c.h.b16 %v313
    %v420 = vunpack.c.l.b16 %v314
    %v421 = vunpack.c.h.b16 %v314
    %v422 = vunpack.c.l.b16 %v315
    %v423 = vunpack.c.h.b16 %v315
    %v424 = vpack.c.b16 %v362, %v360
    %v425 = vpack.c.b16 %v363, %v361
    %v426 = vpack.c.b16 %v366, %v364
    %v427 = vpack.c.b16 %v367, %v365
    %v428 = vpack.c.b16 %v370, %v368
    %v429 = vpack.c.b16 %v371, %v369
    %v430 = vpack.c.b16 %v374, %v372
    %v431 = vpack.c.b16 %v375, %v373
    %v432 = vpack.c.b16 %v378, %v376
    %v433 = vpack.c.b16 %v379, %v377
    %v434 = vpack.c.b16 %v382, %v380
    %v435 = vpack.c.b16 %v383, %v381
    %v436 = vpack.c.b16 %v386, %v384
    %v437 = vpack.c.b16 %v387, %v385
    %v438 = vpack.c.b16 %v390, %v388
    %v439 = vpack.c.b16 %v391, %v389
    %v440 = vpack.c.b16 %v394, %v392
    %v441 = vpack.c.b16 %v395, %v393
    %v442 = vpack.c.b16 %v398, %v396
    %v443 = vpack.c.b16 %v399, %v397
    %v444 = vpack.c.b16 %v402, %v400
    %v445 = vpack.c.b16 %v403, %v401
    %v446 = vpack.c.b16 %v406, %v404
    %v447 = vpack.c.b16 %v407, %v405
    %v448 = vpack.c.b16 %v410, %v408
    %v449 = vpack.c.b16 %v411, %v409
    %v450 = vpack.c.b16 %v414, %v412
    %v451 = vpack.c.b16 %v415, %v413
    %v452 = vpack.c.b16 %v418, %v416
    %v453 = vpack.c.b16 %v419, %v417
    %v454 = vpack.c.b16 %v422, %v420
    %v455 = vpack.c.b16 %v423, %v421
    %488 = vmatprep.subr.bf16.mxu0 %v425
    %489 = vmatpush1.bf16.msra.mxu0 %v424
    %490 = vmatprep.subr.bf16.mxu0 %v427
    %491 = vmatpush1.bf16.msra.mxu0 %v426
    %492 = vmatprep.subr.bf16.mxu0 %v429
    %493 = vmatpush1.bf16.msra.mxu0 %v428
    %494 = vmatprep.subr.bf16.mxu0 %v431
    %495 = vmatpush1.bf16.msra.mxu0 %v430
    %496 = vmatprep.subr.bf16.mxu0 %v433
    %497 = vmatpush1.bf16.msra.mxu0 %v432
    %498 = vmatprep.subr.bf16.mxu0 %v435
    %499 = vmatpush1.bf16.msra.mxu0 %v434
    %500 = vmatprep.subr.bf16.mxu0 %v437
    %501 = vmatpush1.bf16.msra.mxu0 %v436
    %502 = vmatprep.subr.bf16.mxu0 %v439
    %503 = vmatpush1.bf16.msra.mxu0 %v438
    %504 = vmatprep.subr.bf16.mxu0 %v441
    %505 = vmatpush1.bf16.msra.mxu0 %v440
    %506 = vmatprep.subr.bf16.mxu0 %v443
    %507 = vmatpush1.bf16.msra.mxu0 %v442
    %508 = vmatprep.subr.bf16.mxu0 %v445
    %509 = vmatpush1.bf16.msra.mxu0 %v444
    %510 = vmatprep.subr.bf16.mxu0 %v447
    %511 = vmatpush1.bf16.msra.mxu0 %v446
    %512 = vmatprep.subr.bf16.mxu0 %v449
    %513 = vmatpush1.bf16.msra.mxu0 %v448
    %514 = vmatprep.subr.bf16.mxu0 %v451
    %515 = vmatpush1.bf16.msra.mxu0 %v450
    %516 = vmatprep.subr.bf16.mxu0 %v453
    %517 = vmatpush1.bf16.msra.mxu0 %v452
    %518 = vmatprep.subr.bf16.mxu0 %v455
    %519 = vmatpush1.bf16.msra.mxu0 %v454
    %520 = vmatprep.mubr.bf16.mxu0 %v283
    %521 = vmatmul.mubr.bf16.gmra.mrb[0].mxu0 %v282
    %v522 = vpop.f32.mrb[0].mxu0
    %v523 = vadd.f32 %v321, %v522
    %v524 = vpop.f32.mrb[0].mxu0
    %v525 = vadd.f32 %v325, %v524
    %v526 = vpop.f32.mrb[0].mxu0
    %v527 = vpop.f32.mrb[0].mxu0
    %528 = vdwg.mxu0
    %v529 = vmax.f32 %v523, 0.0
    %v530 = vmax.f32 %v525, 0.0
    %v531 = vpack.c.bf16 %v529, %v529
    %v532 = vpack.c.bf16 %v530, %v530
    %v533 = vld [vmem:[#allocation8] sm:$0xff]
    %v534 = vld [vmem:[#allocation8 + $0x8] sm:$0xff]
    %v535 = vld [vmem:[#allocation8 + $0x10] sm:$0xff]
    %v536 = vld [vmem:[#allocation8 + $0x18] sm:$0xff]
    %v537 = vld [vmem:[#allocation8 + $0x20] sm:$0xff]
    %v538 = vld [vmem:[#allocation8 + $0x28] sm:$0xff]
    %v539 = vld [vmem:[#allocation8 + $0x30] sm:$0xff]
    %v540 = vld [vmem:[#allocation8 + $0x38] sm:$0xff]
    %v541 = vld [vmem:[#allocation8 + $0x40] sm:$0xff]
    %v542 = vld [vmem:[#allocation8 + $0x48] sm:$0xff]
    %v543 = vld [vmem:[#allocation8 + $0x50] sm:$0xff]
    %v544 = vld [vmem:[#allocation8 + $0x58] sm:$0xff]
    %v545 = vld [vmem:[#allocation8 + $0x60] sm:$0xff]
    %v546 = vld [vmem:[#allocation8 + $0x68] sm:$0xff]
    %v547 = vld [vmem:[#allocation8 + $0x70] sm:$0xff]
    %v548 = vld [vmem:[#allocation8 + $0x78] sm:$0xff]
    %v549 = vld [vmem:[#allocation8 + $0x80] sm:$0xff]
    %v550 = vld [vmem:[#allocation8 + $0x88] sm:$0xff]
    %v551 = vld [vmem:[#allocation8 + $0x90] sm:$0xff]
    %v552 = vld [vmem:[#allocation8 + $0x98] sm:$0xff]
    %v553 = vld [vmem:[#allocation8 + $0xa0] sm:$0xff]
    %v554 = vld [vmem:[#allocation8 + $0xa8] sm:$0xff]
    %v555 = vld [vmem:[#allocation8 + $0xb0] sm:$0xff]
    %v556 = vld [vmem:[#allocation8 + $0xb8] sm:$0xff]
    %v557 = vld [vmem:[#allocation8 + $0xc0] sm:$0xff]
    %v558 = vld [vmem:[#allocation8 + $0xc8] sm:$0xff]
    %v559 = vld [vmem:[#allocation8 + $0xd0] sm:$0xff]
    %v560 = vld [vmem:[#allocation8 + $0xd8] sm:$0xff]
    %v561 = vld [vmem:[#allocation8 + $0xe0] sm:$0xff]
    %v562 = vld [vmem:[#allocation8 + $0xe8] sm:$0xff]
    %v563 = vld [vmem:[#allocation8 + $0xf0] sm:$0xff]
    %v564 = vld [vmem:[#allocation8 + $0xf8] sm:$0xff]
    %v565 = vld [vmem:[%s6] sm:$0x3]
    %v567 = vlaneseq
    %v568 = vshrl.u32 %v567, 7
    %v569 = vsub.s32 0, %v568
    %v570 = vrot.slane %v565, %v569
    %v571 = vlaneseq
    %v572 = vshrl.u32 %v571, 7
    %v573 = vsub.s32 1, %v572
    %v574 = vrot.slane %v565, %v573
    %v609 = vunpack.c.l.b16 %v533
    %v610 = vunpack.c.h.b16 %v533
    %v611 = vunpack.c.l.b16 %v534
    %v612 = vunpack.c.h.b16 %v534
    %v613 = vunpack.c.l.b16 %v535
    %v614 = vunpack.c.h.b16 %v535
    %v615 = vunpack.c.l.b16 %v536
    %v616 = vunpack.c.h.b16 %v536
    %v617 = vunpack.c.l.b16 %v537
    %v618 = vunpack.c.h.b16 %v537
    %v619 = vunpack.c.l.b16 %v538
    %v620 = vunpack.c.h.b16 %v538
    %v621 = vunpack.c.l.b16 %v539
    %v622 = vunpack.c.h.b16 %v539
    %v623 = vunpack.c.l.b16 %v540
    %v624 = vunpack.c.h.b16 %v540
    %v625 = vunpack.c.l.b16 %v541
    %v626 = vunpack.c.h.b16 %v541
    %v627 = vunpack.c.l.b16 %v542
    %v628 = vunpack.c.h.b16 %v542
    %v629 = vunpack.c.l.b16 %v543
    %v630 = vunpack.c.h.b16 %v543
    %v631 = vunpack.c.l.b16 %v544
    %v632 = vunpack.c.h.b16 %v544
    %v633 = vunpack.c.l.b16 %v545
    %v634 = vunpack.c.h.b16 %v545
    %v635 = vunpack.c.l.b16 %v546
    %v636 = vunpack.c.h.b16 %v546
    %v637 = vunpack.c.l.b16 %v547
    %v638 = vunpack.c.h.b16 %v547
    %v639 = vunpack.c.l.b16 %v548
    %v640 = vunpack.c.h.b16 %v548
    %v641 = vunpack.c.l.b16 %v549
    %v642 = vunpack.c.h.b16 %v549
    %v643 = vunpack.c.l.b16 %v550
    %v644 = vunpack.c.h.b16 %v550
    %v645 = vunpack.c.l.b16 %v551
    %v646 = vunpack.c.h.b16 %v551
    %v647 = vunpack.c.l.b16 %v552
    %v648 = vunpack.c.h.b16 %v552
    %v649 = vunpack.c.l.b16 %v553
    %v650 = vunpack.c.h.b16 %v553
    %v651 = vunpack.c.l.b16 %v554
    %v652 = vunpack.c.h.b16 %v554
    %v653 = vunpack.c.l.b16 %v555
    %v654 = vunpack.c.h.b16 %v555
    %v655 = vunpack.c.l.b16 %v556
    %v656 = vunpack.c.h.b16 %v556
    %v657 = vunpack.c.l.b16 %v557
    %v658 = vunpack.c.h.b16 %v557
    %v659 = vunpack.c.l.b16 %v558
    %v660 = vunpack.c.h.b16 %v558
    %v661 = vunpack.c.l.b16 %v559
    %v662 = vunpack.c.h.b16 %v559
    %v663 = vunpack.c.l.b16 %v560
    %v664 = vunpack.c.h.b16 %v560
    %v665 = vunpack.c.l.b16 %v561
    %v666 = vunpack.c.h.b16 %v561
    %v667 = vunpack.c.l.b16 %v562
    %v668 = vunpack.c.h.b16 %v562
    %v669 = vunpack.c.l.b16 %v563
    %v670 = vunpack.c.h.b16 %v563
    %v671 = vunpack.c.l.b16 %v564
    %v672 = vunpack.c.h.b16 %v564
    %v673 = vpack.c.b16 %v611, %v609
    %v674 = vpack.c.b16 %v612, %v610
    %v675 = vpack.c.b16 %v615, %v613
    %v676 = vpack.c.b16 %v616, %v614
    %v677 = vpack.c.b16 %v619, %v617
    %v678 = vpack.c.b16 %v620, %v618
    %v679 = vpack.c.b16 %v623, %v621
    %v680 = vpack.c.b16 %v624, %v622
    %v681 = vpack.c.b16 %v627, %v625
    %v682 = vpack.c.b16 %v628, %v626
    %v683 = vpack.c.b16 %v631, %v629
    %v684 = vpack.c.b16 %v632, %v630
    %v685 = vpack.c.b16 %v635, %v633
    %v686 = vpack.c.b16 %v636, %v634
    %v687 = vpack.c.b16 %v639, %v637
    %v688 = vpack.c.b16 %v640, %v638
    %v689 = vpack.c.b16 %v643, %v641
    %v690 = vpack.c.b16 %v644, %v642
    %v691 = vpack.c.b16 %v647, %v645
    %v692 = vpack.c.b16 %v648, %v646
    %v693 = vpack.c.b16 %v651, %v649
    %v694 = vpack.c.b16 %v652, %v650
    %v695 = vpack.c.b16 %v655, %v653
    %v696 = vpack.c.b16 %v656, %v654
    %v697 = vpack.c.b16 %v659, %v657
    %v698 = vpack.c.b16 %v660, %v658
    %v699 = vpack.c.b16 %v663, %v661
    %v700 = vpack.c.b16 %v664, %v662
    %v701 = vpack.c.b16 %v667, %v665
    %v702 = vpack.c.b16 %v668, %v666
    %v703 = vpack.c.b16 %v671, %v669
    %v704 = vpack.c.b16 %v672, %v670
    %737 = vmatprep.subr.bf16.mxu0 %v674
    %738 = vmatpush1.bf16.msra.mxu0 %v673
    %739 = vmatprep.subr.bf16.mxu0 %v676
    %740 = vmatpush1.bf16.msra.mxu0 %v675
    %741 = vmatprep.subr.bf16.mxu0 %v678
    %742 = vmatpush1.bf16.msra.mxu0 %v677
    %743 = vmatprep.subr.bf16.mxu0 %v680
    %744 = vmatpush1.bf16.msra.mxu0 %v679
    %745 = vmatprep.subr.bf16.mxu0 %v682
    %746 = vmatpush1.bf16.msra.mxu0 %v681
    %747 = vmatprep.subr.bf16.mxu0 %v684
    %748 = vmatpush1.bf16.msra.mxu0 %v683
    %749 = vmatprep.subr.bf16.mxu0 %v686
    %750 = vmatpush1.bf16.msra.mxu0 %v685
    %751 = vmatprep.subr.bf16.mxu0 %v688
    %752 = vmatpush1.bf16.msra.mxu0 %v687
    %753 = vmatprep.subr.bf16.mxu0 %v690
    %754 = vmatpush1.bf16.msra.mxu0 %v689
    %755 = vmatprep.subr.bf16.mxu0 %v692
    %756 = vmatpush1.bf16.msra.mxu0 %v691
    %757 = vmatprep.subr.bf16.mxu0 %v694
    %758 = vmatpush1.bf16.msra.mxu0 %v693
    %759 = vmatprep.subr.bf16.mxu0 %v696
    %760 = vmatpush1.bf16.msra.mxu0 %v695
    %761 = vmatprep.subr.bf16.mxu0 %v698
    %762 = vmatpush1.bf16.msra.mxu0 %v697
    %763 = vmatprep.subr.bf16.mxu0 %v700
    %764 = vmatpush1.bf16.msra.mxu0 %v699
    %765 = vmatprep.subr.bf16.mxu0 %v702
    %766 = vmatpush1.bf16.msra.mxu0 %v701
    %767 = vmatprep.subr.bf16.mxu0 %v704
    %768 = vmatpush1.bf16.msra.mxu0 %v703
    %769 = vmatprep.mubr.bf16.mxu0 %v532
    %770 = vmatmul.mubr.bf16.gmra.mrb[0].mxu0 %v531
    %v771 = vpop.f32.mrb[0].mxu0
    %v772 = vadd.f32 %v570, %v771
    %v773 = vpop.f32.mrb[0].mxu0
    %v774 = vadd.f32 %v574, %v773
    %v775 = vpop.f32.mrb[0].mxu0
    %v776 = vpop.f32.mrb[0].mxu0
    %777 = vdwg.mxu0
    %v778 = vmax.f32 %v772, 0.0
    %v779 = vmax.f32 %v774, 0.0
    %v780 = vpack.c.bf16 %v778, %v778
    %v781 = vpack.c.bf16 %v779, %v779
    %v782 = vld [vmem:[#allocation10] sm:$0xf]
    %v783 = vld [vmem:[#allocation10 + $0x4] sm:$0xf]
    %v784 = vld [vmem:[#allocation10 + $0x8] sm:$0xf]
    %v785 = vld [vmem:[#allocation10 + $0xc] sm:$0xf]
    %v786 = vld [vmem:[#allocation10 + $0x10] sm:$0xf]
    %v787 = vld [vmem:[#allocation10 + $0x14] sm:$0xf]
    %v788 = vld [vmem:[#allocation10 + $0x18] sm:$0xf]
    %v789 = vld [vmem:[#allocation10 + $0x1c] sm:$0xf]
    %v790 = vld [vmem:[#allocation10 + $0x20] sm:$0xf]
    %v791 = vld [vmem:[#allocation10 + $0x24] sm:$0xf]
    %v792 = vld [vmem:[#allocation10 + $0x28] sm:$0xf]
    %v793 = vld [vmem:[#allocation10 + $0x2c] sm:$0xf]
    %v794 = vld [vmem:[#allocation10 + $0x30] sm:$0xf]
    %v795 = vld [vmem:[#allocation10 + $0x34] sm:$0xf]
    %v796 = vld [vmem:[#allocation10 + $0x38] sm:$0xf]
    %v797 = vld [vmem:[#allocation10 + $0x3c] sm:$0xf]
    %v798 = vld [vmem:[#allocation10 + $0x40] sm:$0xf]
    %v799 = vld [vmem:[#allocation10 + $0x44] sm:$0xf]
    %v800 = vld [vmem:[#allocation10 + $0x48] sm:$0xf]
    %v801 = vld [vmem:[#allocation10 + $0x4c] sm:$0xf]
    %v802 = vld [vmem:[#allocation10 + $0x50] sm:$0xf]
    %v803 = vld [vmem:[#allocation10 + $0x54] sm:$0xf]
    %v804 = vld [vmem:[#allocation10 + $0x58] sm:$0xf]
    %v805 = vld [vmem:[#allocation10 + $0x5c] sm:$0xf]
    %v806 = vld [vmem:[#allocation10 + $0x60] sm:$0xf]
    %v807 = vld [vmem:[#allocation10 + $0x64] sm:$0xf]
    %v808 = vld [vmem:[#allocation10 + $0x68] sm:$0xf]
    %v809 = vld [vmem:[#allocation10 + $0x6c] sm:$0xf]
    %v810 = vld [vmem:[#allocation10 + $0x70] sm:$0xf]
    %v811 = vld [vmem:[#allocation10 + $0x74] sm:$0xf]
    %v812 = vld [vmem:[#allocation10 + $0x78] sm:$0xf]
    %v813 = vld [vmem:[#allocation10 + $0x7c] sm:$0xf]
    %v814 = vld [vmem:[%s8] sm:$0x1]
    %v816 = vlaneseq
    %v817 = vshrl.u32 %v816, 7
    %v818 = vsub.s32 0, %v817
    %v819 = vrot.slane %v814, %v818
    %v853 = vunpack.c.l.b16 %v782
    %v854 = vunpack.c.l.b16 %v783
    %v855 = vunpack.c.l.b16 %v784
    %v856 = vunpack.c.l.b16 %v785
    %v857 = vunpack.c.l.b16 %v786
    %v858 = vunpack.c.l.b16 %v787
    %v859 = vunpack.c.l.b16 %v788
    %v860 = vunpack.c.l.b16 %v789
    %v861 = vunpack.c.l.b16 %v790
    %v862 = vunpack.c.l.b16 %v791
    %v863 = vunpack.c.l.b16 %v792
    %v864 = vunpack.c.l.b16 %v793
    %v865 = vunpack.c.l.b16 %v794
    %v866 = vunpack.c.l.b16 %v795
    %v867 = vunpack.c.l.b16 %v796
    %v868 = vunpack.c.l.b16 %v797
    %v869 = vunpack.c.l.b16 %v798
    %v870 = vunpack.c.l.b16 %v799
    %v871 = vunpack.c.l.b16 %v800
    %v872 = vunpack.c.l.b16 %v801
    %v873 = vunpack.c.l.b16 %v802
    %v874 = vunpack.c.l.b16 %v803
    %v875 = vunpack.c.l.b16 %v804
    %v876 = vunpack.c.l.b16 %v805
    %v877 = vunpack.c.l.b16 %v806
    %v878 = vunpack.c.l.b16 %v807
    %v879 = vunpack.c.l.b16 %v808
    %v880 = vunpack.c.l.b16 %v809
    %v881 = vunpack.c.l.b16 %v810
    %v882 = vunpack.c.l.b16 %v811
    %v883 = vunpack.c.l.b16 %v812
    %v884 = vunpack.c.l.b16 %v813
    %v885 = vpack.c.b16 %v854, %v853
    %v886 = vpack.c.b16 %v856, %v855
    %v887 = vpack.c.b16 %v858, %v857
    %v888 = vpack.c.b16 %v860, %v859
    %v889 = vpack.c.b16 %v862, %v861
    %v890 = vpack.c.b16 %v864, %v863
    %v891 = vpack.c.b16 %v866, %v865
    %v892 = vpack.c.b16 %v868, %v867
    %v893 = vpack.c.b16 %v870, %v869
    %v894 = vpack.c.b16 %v872, %v871
    %v895 = vpack.c.b16 %v874, %v873
    %v896 = vpack.c.b16 %v876, %v875
    %v897 = vpack.c.b16 %v878, %v877
    %v898 = vpack.c.b16 %v880, %v879
    %v899 = vpack.c.b16 %v882, %v881
    %v900 = vpack.c.b16 %v884, %v883
    %917 = vmatprep.subr.bf16.mxu0 0
    %918 = vmatpush1.bf16.msra.mxu0 %v885
    %919 = vmatprep.subr.bf16.mxu0 0
    %920 = vmatpush1.bf16.msra.mxu0 %v886
    %921 = vmatprep.subr.bf16.mxu0 0
    %922 = vmatpush1.bf16.msra.mxu0 %v887
    %923 = vmatprep.subr.bf16.mxu0 0
    %924 = vmatpush1.bf16.msra.mxu0 %v888
    %925 = vmatprep.subr.bf16.mxu0 0
    %926 = vmatpush1.bf16.msra.mxu0 %v889
    %927 = vmatprep.subr.bf16.mxu0 0
    %928 = vmatpush1.bf16.msra.mxu0 %v890
    %929 = vmatprep.subr.bf16.mxu0 0
    %930 = vmatpush1.bf16.msra.mxu0 %v891
    %931 = vmatprep.subr.bf16.mxu0 0
    %932 = vmatpush1.bf16.msra.mxu0 %v892
    %933 = vmatprep.subr.bf16.mxu0 0
    %934 = vmatpush1.bf16.msra.mxu0 %v893
    %935 = vmatprep.subr.bf16.mxu0 0
    %936 = vmatpush1.bf16.msra.mxu0 %v894
    %937 = vmatprep.subr.bf16.mxu0 0
    %938 = vmatpush1.bf16.msra.mxu0 %v895
    %939 = vmatprep.subr.bf16.mxu0 0
    %940 = vmatpush1.bf16.msra.mxu0 %v896
    %941 = vmatprep.subr.bf16.mxu0 0
    %942 = vmatpush1.bf16.msra.mxu0 %v897
    %943 = vmatprep.subr.bf16.mxu0 0
    %944 = vmatpush1.bf16.msra.mxu0 %v898
    %945 = vmatprep.subr.bf16.mxu0 0
    %946 = vmatpush1.bf16.msra.mxu0 %v899
    %947 = vmatprep.subr.bf16.mxu0 0
    %948 = vmatpush1.bf16.msra.mxu0 %v900
    %949 = vmatprep.mubr.bf16.mxu0 %v781
    %950 = vmatmul.mubr.bf16.gmra.mrb[0].mxu0 %v780
    %v951 = vpop.f32.mrb[0].mxu0
    %v952 = vadd.f32 %v819, %v951
    %v953 = vpop.f32.mrb[0].mxu0
    %v954 = vpop.f32.mrb[0].mxu0
    %v955 = vpop.f32.mrb[0].mxu0
    %956 = vdwg.mxu0
    %v957 = vmax.f32 %v952, 0.0
    %v958 = vpack.c.bf16 %v957, %v957
    %v959 = vld [vmem:[#allocation11] sm:$0xf]
    %v960 = vld [vmem:[#allocation11 + $0x4] sm:$0xf]
    %v961 = vld [vmem:[#allocation11 + $0x8] sm:$0xf]
    %v962 = vld [vmem:[#allocation11 + $0xc] sm:$0xf]
    %v963 = vld [vmem:[#allocation11 + $0x10] sm:$0xf]
    %v964 = vld [vmem:[#allocation11 + $0x14] sm:$0xf]
    %v965 = vld [vmem:[#allocation11 + $0x18] sm:$0xf]
    %v966 = vld [vmem:[#allocation11 + $0x1c] sm:$0xf]
    %v967 = vld [vmem:[#allocation11 + $0x20] sm:$0xf]
    %v968 = vld [vmem:[#allocation11 + $0x24] sm:$0xf]
    %v969 = vld [vmem:[#allocation11 + $0x28] sm:$0xf]
    %v970 = vld [vmem:[#allocation11 + $0x2c] sm:$0xf]
    %v971 = vld [vmem:[#allocation11 + $0x30] sm:$0xf]
    %v972 = vld [vmem:[#allocation11 + $0x34] sm:$0xf]
    %v973 = vld [vmem:[#allocation11 + $0x38] sm:$0xf]
    %v974 = vld [vmem:[#allocation11 + $0x3c] sm:$0xf]
    %v975 = vld [vmem:[%s10] sm:$0x1]
    %v977 = vlaneseq
    %v978 = vshrl.u32 %v977, 7
    %v979 = vsub.s32 0, %v978
    %v980 = vrot.slane %v975, %v979
    %v998 = vunpack.c.l.b16 %v959
    %v999 = vunpack.c.l.b16 %v960
    %v1000 = vunpack.c.l.b16 %v961
    %v1001 = vunpack.c.l.b16 %v962
    %v1002 = vunpack.c.l.b16 %v963
    %v1003 = vunpack.c.l.b16 %v964
    %v1004 = vunpack.c.l.b16 %v965
    %v1005 = vunpack.c.l.b16 %v966
    %v1006 = vunpack.c.l.b16 %v967
    %v1007 = vunpack.c.l.b16 %v968
    %v1008 = vunpack.c.l.b16 %v969
    %v1009 = vunpack.c.l.b16 %v970
    %v1010 = vunpack.c.l.b16 %v971
    %v1011 = vunpack.c.l.b16 %v972
    %v1012 = vunpack.c.l.b16 %v973
    %v1013 = vunpack.c.l.b16 %v974
    %v1014 = vpack.c.b16 %v999, %v998
    %v1015 = vpack.c.b16 %v1001, %v1000
    %v1016 = vpack.c.b16 %v1003, %v1002
    %v1017 = vpack.c.b16 %v1005, %v1004
    %v1018 = vpack.c.b16 %v1007, %v1006
    %v1019 = vpack.c.b16 %v1009, %v1008
    %v1020 = vpack.c.b16 %v1011, %v1010
    %v1021 = vpack.c.b16 %v1013, %v1012
    %1030 = vmatprep.subr.bf16.mxu0 0
    %1031 = vmatpush1.bf16.msra.mxu0 %v1014
    %1032 = vmatprep.subr.bf16.mxu0 0
    %1033 = vmatpush1.bf16.msra.mxu0 %v1015
    %1034 = vmatprep.subr.bf16.mxu0 0
    %1035 = vmatpush1.bf16.msra.mxu0 %v1016
    %1036 = vmatprep.subr.bf16.mxu0 0
    %1037 = vmatpush1.bf16.msra.mxu0 %v1017
    %1038 = vmatprep.subr.bf16.mxu0 0
    %1039 = vmatpush1.bf16.msra.mxu0 %v1018
    %1040 = vmatprep.subr.bf16.mxu0 0
    %1041 = vmatpush1.bf16.msra.mxu0 %v1019
    %1042 = vmatprep.subr.bf16.mxu0 0
    %1043 = vmatpush1.bf16.msra.mxu0 %v1020
    %1044 = vmatprep.subr.bf16.mxu0 0
    %1045 = vmatpush1.bf16.msra.mxu0 %v1021
    %1046 = vmatprep.subr.bf16.mxu0 0
    %1047 = vmatpush1.bf16.msra.mxu0 0
    %1048 = vmatprep.subr.bf16.mxu0 0
    %1049 = vmatpush1.bf16.msra.mxu0 0
    %1050 = vmatprep.subr.bf16.mxu0 0
    %1051 = vmatpush1.bf16.msra.mxu0 0
    %1052 = vmatprep.subr.bf16.mxu0 0
    %1053 = vmatpush1.bf16.msra.mxu0 0
    %1054 = vmatprep.subr.bf16.mxu0 0
    %1055 = vmatpush1.bf16.msra.mxu0 0
    %1056 = vmatprep.subr.bf16.mxu0 0
    %1057 = vmatpush1.bf16.msra.mxu0 0
    %1058 = vmatprep.subr.bf16.mxu0 0
    %1059 = vmatpush1.bf16.msra.mxu0 0
    %1060 = vmatprep.subr.bf16.mxu0 0
    %1061 = vmatpush1.bf16.msra.mxu0 0
    %1062 = vmatprep.mubr.bf16.mxu0 0
    %1063 = vmatmul.mubr.bf16.gmra.mrb[0].mxu0 %v958
    %v1064 = vpop.f32.mrb[0].mxu0
    %v1065 = vadd.f32 %v980, %v1064
    %v1066 = vpop.f32.mrb[0].mxu0
    %v1067 = vpop.f32.mrb[0].mxu0
    %v1068 = vpop.f32.mrb[0].mxu0
    %1069 = vdwg.mxu0
    %1070 = vst [vmem:[#allocation13] sm:$0xff] %v1065
    // Predicated region
    $region70: #{tpu_custom_call.1} parent=1 // pred_check
      _
    $region71: #{tpu_custom_call.1} parent=1 // pred_check_branch
      %1072 = sbr.rel (0) target = $region73
    $region72: #{tpu_custom_call.1} parent=1 // pred_region
      %s1074 = ssub.s32 128, 128
      %1075 = vsyncadd [#allocation4], %s1074
      %s1077 = sshll.u32 [#allocation13], 4
      %s1078 = int_to_ptr.vmem [resolvable:$true] %s1077
      %1080 = dma.vmem_to_hbm [thread:$0]  %s1078, 128, %s11, [#allocation4]
    $region73: #{tpu_custom_call.1} parent=1 // pred_fallthru
      _
    // Predicated region
    $region74: #{tpu_custom_call.1} parent=1 // pred_check
      _
    $region75: #{tpu_custom_call.1} parent=1 // pred_check_branch
      %1082 = sbr.rel (0) target = $region77
    $region76: #{tpu_custom_call.1} parent=1 // pred_region
      %1083 = dma.done [#allocation4], 128
    $region77: #{tpu_custom_call.1} parent=1 // pred_fallthru
      _
    %1084 = vsyncpa [#allocation3], 1
    %1085 = vsyncpa [#allocation6], 1
    %1086 = vsyncpa [#allocation9], 1
    %1087 = vsyncpa [#allocation12], 1
    %1088 = vsyncpa [#allocation4], 1

</llo_original>
